<compile_context>
chip_gen: v6e
topology: v6e:2x2x1
jax: 0.10.0
libtpu: 0.0.40
codegen_flags: <defaults>
</compile_context>

<pallas_src>
import functools

import jax
import jax.numpy as jnp
from jax.experimental import pallas as pl
from jax.experimental.pallas import tpu as pltpu


def _mod_sin_kernel(gb_ref, x_ref, o_ref, *, inv_c):
    # gb_ref: (1, 2, C) f32 (gain row 0, bias row 1); x_ref / o_ref: (1, TN, C)
    gb = gb_ref[...]                                       # (1, 2, C)
    gain = gb[0, 0][None, :]                               # (1, C)
    bias = gb[0, 1][None, :]                               # (1, C)

    xf = x_ref[0].astype(jnp.float32)                      # (TN, C)
    sum_sq = jnp.sum(xf * xf, axis=-1, keepdims=True)      # (TN, 1)
    inv = jax.lax.rsqrt(sum_sq * inv_c + 1e-8)             # RMS normalizer
    y = xf * inv * gain + bias                             # modulation (bcast over N)
    out = jnp.maximum(y, 0.2 * y)                          # LeakyReLU(0.2)
    o_ref[...] = out[None].astype(o_ref.dtype)


def _vmem_params():
    """(tile_budget_bytes, vmem_limit_bytes), generation-aware."""
    try:
        phys = int(pltpu.get_tpu_info().vmem_capacity_bytes)
    except Exception:
        phys = 64 * 1024 * 1024                 # conservative (v7x) fallback
    if phys <= 64 * 1024 * 1024:                # v7x: 64 MiB physical VMEM
        return 20 * 1024 * 1024, 32 * 1024 * 1024
    return 40 * 1024 * 1024, 64 * 1024 * 1024   # v5e / v6e: 128 MiB physical


def _choose_tn(b, n, c, itemsize, tile_budget):
    """Largest N-tile (multiple of 8) fitting the byte budget, keeping >=4 grid steps."""
    # double-buffered x + out tiles, plus headroom for f32 intermediates in VMEM.
    per_row = 2 * 2 * c * itemsize + 2 * 4 * c
    tn = max(8, (tile_budget // per_row) // 8 * 8)
    if n <= tn:
        return n                                 # full extent — always legal
    # Keep at least ~4 total grid steps so both v7x TensorCores get work and the
    # double-buffer pipeline has something to overlap.
    min_steps = 4
    if b * pl.cdiv(n, tn) < min_steps:
        tiles_needed = -(-min_steps // b)        # ceil(min_steps / b)
        tn_small = -(-n // tiles_needed)         # ceil(n / tiles_needed)
        tn_small = max(8, ((tn_small + 7) // 8) * 8)
        tn = min(tn, tn_small)
    if n <= tn:
        return n
    return tn


def mod_sin_layer(x, style, wg, bg, wb, bb):
    """x: (B, N, C), style: (B, S), wg/wb: (C, S) (torch layout), bg/bb: (C,)."""
    B, N, C = x.shape

    # ---- gain / bias precompute: one fused (B,S)@(S,2C) matmul in XLA --------
    w_cat = jnp.concatenate([wg, wb], axis=0).astype(jnp.float32)   # (2C, S)
    gb = style.astype(jnp.float32) @ w_cat.T                        # (B, 2C)
    gain = gb[:, :C] + bg.astype(jnp.float32) + 1.0                 # (B, C)
    bias = gb[:, C:] + bb.astype(jnp.float32)                       # (B, C)
    gb_packed = jnp.stack([gain, bias], axis=1)                     # (B, 2, C) f32

    # ---- tiling (no channel padding: full-extent C block is legal) -----------
    itemsize = jnp.dtype(x.dtype).itemsize
    tile_budget, vmem_limit = _vmem_params()
    tn = _choose_tn(B, N, C, itemsize, tile_budget)
    grid = (B, pl.cdiv(N, tn))

    kernel = functools.partial(_mod_sin_kernel, inv_c=1.0 / float(C))

    cost = pl.CostEstimate(
        flops=7 * B * N * C,
        transcendentals=B * N,
        bytes_accessed=2 * B * N * C * itemsize + 2 * B * C * 4,
    )

    out = pl.pallas_call(
        kernel,
        out_shape=jax.ShapeDtypeStruct((B, N, C), x.dtype),
        grid_spec=pl.GridSpec(
            grid=grid,
            in_specs=[
                pl.BlockSpec((1, 2, C), lambda b, j: (b, 0, 0)),     # gain/bias (per batch)
                pl.BlockSpec((1, tn, C), lambda b, j: (b, j, 0)),    # x tile
            ],
            out_specs=pl.BlockSpec((1, tn, C), lambda b, j: (b, j, 0)),
        ),
        compiler_params=pltpu.CompilerParams(
            dimension_semantics=("parallel", "parallel"),
            vmem_limit_bytes=vmem_limit,
        ),
        cost_estimate=cost,
    )(gb_packed, x)

    return out


def mod_sin_layer_ref(x, style, wg, bg, wb, bb):
    gain = style @ wg.T + bg + 1.0
    bias = style @ wb.T + bb
    gain = gain[:, None, :]
    bias = bias[:, None, :]
    xn = x * jax.lax.rsqrt(jnp.mean(x * x, axis=-1, keepdims=True) + 1e-8)
    y = xn * gain + bias
    return jnp.where(y >= 0, y, 0.2 * y)


if __name__ == "__main__":
    # Small shapes: batch=2, tokens=8, in_dim=32, style_dim=16.
    B, N, C, S = 2, 8, 32, 16
    key = jax.random.PRNGKey(0)
    kx, ks, kwg, kbg, kwb, kbb = jax.random.split(key, 6)

    x = jax.random.normal(kx, (B, N, C), dtype=jnp.float32)
    style = jax.random.normal(ks, (B, S), dtype=jnp.float32)

    # nn.Linear(style_dim, in_dim) shapes: W (C, S), b (C,)
    wg = jax.random.normal(kwg, (C, S), dtype=jnp.float32) * 0.1
    bg = jax.random.normal(kbg, (C,), dtype=jnp.float32) * 0.1
    wb = jax.random.normal(kwb, (C, S), dtype=jnp.float32) * 0.1
    bb = jax.random.normal(kbb, (C,), dtype=jnp.float32) * 0.1

    out = mod_sin_layer(x, style, wg, bg, wb, bb)
    out = jax.block_until_ready(out)

    ref = mod_sin_layer_ref(x, style, wg, bg, wb, bb)
    assert out.shape == ref.shape, "shape mismatch vs reference"
    assert jnp.allclose(out, ref, atol=1e-5, rtol=1e-5), "mismatch vs reference"

    print("KERNEL_OK")
</pallas_src>

<mosaic_0001>
module attributes {stable_mosaic.version = 11 : i64} {
  func.func @_mod_sin_kernel(%arg0: i32, %arg1: i32, %arg2: memref<1x2x32xf32, #tpu.memory_space<vmem>>, %arg3: memref<1x8x32xf32, #tpu.memory_space<vmem>>, %arg4: memref<1x8x32xf32, #tpu.memory_space<vmem>>) attributes {dimension_semantics = [#tpu.dimension_semantics<parallel>, #tpu.dimension_semantics<parallel>], iteration_bounds = array<i64: 2, 1>, scalar_prefetch = 0 : i64, scratch_operands = 0 : i64, tpu.core_type = #tpu.core_type<tc>, window_params = [{transform_indices = @transform_0, window_bounds = array<i64: 1, 2, 32>}, {transform_indices = @transform_1, window_bounds = array<i64: 1, 8, 32>}, {transform_indices = @transform_2, window_bounds = array<i64: 1, 8, 32>}]} {
    %c0 = arith.constant 0 : index
    %c0_0 = arith.constant 0 : index
    %c0_1 = arith.constant 0 : index
    %0 = vector.load %arg2[%c0, %c0_0, %c0_1] : memref<1x2x32xf32, #tpu.memory_space<vmem>>, vector<1x2x32xf32>
    %1 = vector.extract_strided_slice %0 {offsets = [0, 0, 0], sizes = [1, 1, 32], strides = [1, 1, 1]} : vector<1x2x32xf32> to vector<1x1x32xf32>
    %2 = vector.shape_cast %1 : vector<1x1x32xf32> to vector<32xf32>
    %3 = vector.shape_cast %2 : vector<32xf32> to vector<1x32xf32>
    %4 = vector.extract_strided_slice %0 {offsets = [0, 1, 0], sizes = [1, 1, 32], strides = [1, 1, 1]} : vector<1x2x32xf32> to vector<1x1x32xf32>
    %5 = vector.shape_cast %4 : vector<1x1x32xf32> to vector<32xf32>
    %6 = vector.shape_cast %5 : vector<32xf32> to vector<1x32xf32>
    %c0_2 = arith.constant 0 : index
    %c0_3 = arith.constant 0 : index
    %c0_4 = arith.constant 0 : index
    %7 = vector.load %arg3[%c0_2, %c0_3, %c0_4] : memref<1x8x32xf32, #tpu.memory_space<vmem>>, vector<1x8x32xf32>
    %8 = vector.shape_cast %7 : vector<1x8x32xf32> to vector<8x32xf32>
    %9 = arith.mulf %8, %8 : vector<8x32xf32>
    %cst = arith.constant dense<0.000000e+00> : vector<8xf32>
    %10 = vector.multi_reduction <add>, %9, %cst [1] : vector<8x32xf32> to vector<8xf32>
    %11 = vector.shape_cast %10 : vector<8xf32> to vector<8x1xf32>
    %cst_5 = arith.constant 3.125000e-02 : f32
    %12 = vector.broadcast %cst_5 : f32 to vector<8x1xf32>
    %13 = arith.mulf %11, %12 : vector<8x1xf32>
    %cst_6 = arith.constant 9.99999993E-9 : f32
    %14 = vector.broadcast %cst_6 : f32 to vector<8x1xf32>
    %15 = arith.addf %13, %14 : vector<8x1xf32>
    %16 = math.rsqrt %15 : vector<8x1xf32>
    %17 = vector.broadcast %16 : vector<8x1xf32> to vector<8x32xf32>
    %18 = arith.mulf %8, %17 : vector<8x32xf32>
    %19 = vector.broadcast %3 : vector<1x32xf32> to vector<8x32xf32>
    %20 = arith.mulf %18, %19 : vector<8x32xf32>
    %21 = vector.broadcast %6 : vector<1x32xf32> to vector<8x32xf32>
    %22 = arith.addf %20, %21 : vector<8x32xf32>
    %cst_7 = arith.constant 2.000000e-01 : f32
    %23 = vector.broadcast %cst_7 : f32 to vector<8x32xf32>
    %24 = arith.mulf %23, %22 : vector<8x32xf32>
    %25 = arith.maximumf %22, %24 : vector<8x32xf32>
    %26 = vector.shape_cast %25 : vector<8x32xf32> to vector<1x8x32xf32>
    %c0_8 = arith.constant 0 : index
    %c0_9 = arith.constant 0 : index
    %c0_10 = arith.constant 0 : index
    %27 = vector.load %arg4[%c0_8, %c0_9, %c0_10] : memref<1x8x32xf32, #tpu.memory_space<vmem>>, vector<1x8x32xf32>
    tpu.vector_store %arg4[%c0_8, %c0_9, %c0_10], %26 {strides = array<i32>} : memref<1x8x32xf32, #tpu.memory_space<vmem>>, vector<1x8x32xf32>,
    return
  }
  func.func @transform_0(%arg0: i32, %arg1: i32) -> (i32, i32, i32) {
    %c0_i32 = arith.constant 0 : i32
    %c0_i32_0 = arith.constant 0 : i32
    %c0_i32_1 = arith.constant 0 : i32
    return %arg0, %c0_i32, %c0_i32_0 : i32, i32, i32
  }
  func.func @transform_1(%arg0: i32, %arg1: i32) -> (i32, i32, i32) {
    %c0_i32 = arith.constant 0 : i32
    %c0_i32_0 = arith.constant 0 : i32
    return %arg0, %arg1, %c0_i32 : i32, i32, i32
  }
  func.func @transform_2(%arg0: i32, %arg1: i32) -> (i32, i32, i32) {
    %c0_i32 = arith.constant 0 : i32
    %c0_i32_0 = arith.constant 0 : i32
    return %arg0, %arg1, %c0_i32 : i32, i32, i32
  }
}

</mosaic_0001>

<llo_original>
// kernel: tpu_custom_call.1
$region0: #{tpu_custom_call.1}
  #allocation0 [shape = 'u32[]', space=smem, size = 0x4, offset = 0x4, fixed_abs, tag = 'smem constant byte address 0x4 - core index']
  #allocation1 [shape = 'u32[144,128]{1,0:T(1,128)}', space=vmem, size = 0x12000, scoped, tag = 'internal scratch']
  %s0 = inlined_call_operand.hbm [shape: f32[2,2,32], index: 0, kind: input, shape index: {}]
  %s1 = inlined_call_operand.hbm [shape: f32[2,8,32], index: 1, kind: input, shape index: {}]
  %s2 = inlined_call_operand.hbm [shape: f32[2,8,32], index: 2, kind: output, shape index: {}]
  %s3 = sld [smem:[#allocation0]]
  $region49: #{tpu_custom_call.1} parent=0
    _
  %s5 = ssub.s32 1, %s3
  %s6 = scalar_select 0, %s5, %s3
  $region1: #{tpu_custom_call.1} parent=0
    #allocation2 [shape = 'u8[2048]{0}', space=vmem, size = 0x800, scoped, tag = 'input window, operand 0']
    #allocation3 [shape = 's32[2]{0}', space=sflag, size = 0x8, scoped, tag = 'scoped memory for tpu_custom_call.1']
    #allocation4 [shape = 's32[2]{0}', space=sflag, size = 0x8, scoped, tag = 'scoped memory for tpu_custom_call.1']
    #allocation5 [shape = 'u8[8192]{0}', space=vmem, size = 0x2000, scoped, tag = 'input window, operand 1']
    #allocation6 [shape = 's32[2]{0}', space=sflag, size = 0x8, scoped, tag = 'scoped memory for tpu_custom_call.1']
    #allocation7 [shape = 'u8[8192]{0}', space=vmem, size = 0x2000, scoped, tag = 'output window, operand 0']
    %7 = vsyncpa [#allocation3], 0
    %s8 = scalar_lea.sflag [#allocation3], 1
    %9 = vsyncpa %s8, 0
    %10 = vsyncpa [#allocation6], 0
    %s11 = scalar_lea.sflag [#allocation6], 1
    %12 = vsyncpa %s11, 0
    %13 = vsyncpa [#allocation4], 0
    %s14 = scalar_lea.sflag [#allocation4], 1
    %15 = vsyncpa %s14, 0
    loop: start=0, step=1, limit=4
    $region2: #{tpu_custom_call.1} parent=1 // loop_pre_header
      _
    $region3: #{tpu_custom_call.1} parent=1 // loop_header
      %s17 = sphi 0, %s21
      %p18 = scmp.ge.s32.totalorder %s17, 4
      %s24 = sphi 0, %s36
      %s25 = sphi 0, %s32
      %s26 = sphi 0, %s24
      %s27 = sphi 0, %s25
      %s28 = sphi 0, %s26
      %s29 = sphi 0, %s27
      %s39 = sphi 0, %s41
      %s42 = sphi 0, %s39
      %s43 = sphi 0, %s42
      %s59 = sphi 0, %s43
      %s67 = sphi 0, %s69
      %s70 = sphi 0, %s67
      %s71 = sphi 0, %s70
      %s87 = sphi 0, %s71
      %s95 = sphi 0, %s97
      %s98 = sphi 0, %s95
      %s99 = sphi 0, %s98
      %s115 = sphi 0, %s99
    $region4: #{tpu_custom_call.1} parent=1 // loop_header_branch
      %20 = sbr.rel (%p18) target = $region8
    $region5: #{tpu_custom_call.1} parent=1 // loop_body
      %s22 = ssub.s32 %s17, 1
      %s23 = ssub.s32 %s17, 2
      %s30 = sadd.s32 1, %s25
      %p31 = scmp.ge.s32.totalorder %s30, 1
      %s32 = scalar_select %p31, 0, %s30
      %s33 = sadd.s32 1, %s24
      %s34 = scalar_select %p31, %s33, %s24
      %p35 = scmp.ge.s32.totalorder %s34, 2
      %s36 = scalar_select %p35, 0, %s34
      %s37 = ssub.s32 %s24, %s36
      %p38 = scmp.eq.s32.totalorder %s37, 0
      %s40 = sadd.s32 %s39, 1
      %s41 = scalar_select %p38, %s39, %s40
      %p44 = pneg %p38
      %p45 = scmp.eq.s32.totalorder %s17, 1
      %p46 = por %p44, %p45
      %p47 = scmp.ne.s32.totalorder %s39, %s42
      %p48 = scmp.eq.s32.totalorder %s17, 0
      %p49 = por %p47, %p48
      %p50 = scmp.ne.s32.totalorder %s39, %s42
      %p51 = scmp.eq.s32.totalorder %s22, 1
      %p52 = por %p50, %p51
      %p53 = scmp.ne.s32.totalorder %s42, %s43
      %p54 = scmp.eq.s32.totalorder %s22, 0
      %p55 = por %p53, %p54
      %p56 = scmp.ne.s32.totalorder %s42, %s43
      %p57 = scmp.eq.s32.totalorder %s23, 1
      %p58 = por %p56, %p57
      %p60 = scmp.ne.s32.totalorder %s43, %s59
      %p61 = scmp.eq.s32.totalorder %s23, 0
      %p62 = por %p60, %p61
      %s63 = ssub.s32 %s24, %s36
      %s64 = ssub.s32 %s25, %s32
      %s65 = sor.u32 %s63, %s64
      %p66 = scmp.eq.s32.totalorder %s65, 0
      %s68 = sadd.s32 %s67, 1
      %s69 = scalar_select %p66, %s67, %s68
      %p72 = pneg %p66
      %p73 = scmp.eq.s32.totalorder %s17, 1
      %p74 = por %p72, %p73
      %p75 = scmp.ne.s32.totalorder %s67, %s70
      %p76 = scmp.eq.s32.totalorder %s17, 0
      %p77 = por %p75, %p76
      %p78 = scmp.ne.s32.totalorder %s67, %s70
      %p79 = scmp.eq.s32.totalorder %s22, 1
      %p80 = por %p78, %p79
      %p81 = scmp.ne.s32.totalorder %s70, %s71
      %p82 = scmp.eq.s32.totalorder %s22, 0
      %p83 = por %p81, %p82
      %p84 = scmp.ne.s32.totalorder %s70, %s71
      %p85 = scmp.eq.s32.totalorder %s23, 1
      %p86 = por %p84, %p85
      %p88 = scmp.ne.s32.totalorder %s71, %s87
      %p89 = scmp.eq.s32.totalorder %s23, 0
      %p90 = por %p88, %p89
      %s91 = ssub.s32 %s24, %s36
      %s92 = ssub.s32 %s25, %s32
      %s93 = sor.u32 %s91, %s92
      %p94 = scmp.eq.s32.totalorder %s93, 0
      %s96 = sadd.s32 %s95, 1
      %s97 = scalar_select %p94, %s95, %s96
      %p100 = pneg %p94
      %p101 = scmp.eq.s32.totalorder %s17, 1
      %p102 = por %p100, %p101
      %p103 = scmp.ne.s32.totalorder %s95, %s98
      %p104 = scmp.eq.s32.totalorder %s17, 0
      %p105 = por %p103, %p104
      %p106 = scmp.ne.s32.totalorder %s95, %s98
      %p107 = scmp.eq.s32.totalorder %s22, 1
      %p108 = por %p106, %p107
      %p109 = scmp.ne.s32.totalorder %s98, %s99
      %p110 = scmp.eq.s32.totalorder %s22, 0
      %p111 = por %p109, %p110
      %p112 = scmp.ne.s32.totalorder %s98, %s99
      %p113 = scmp.eq.s32.totalorder %s23, 1
      %p114 = por %p112, %p113
      %p116 = scmp.ne.s32.totalorder %s99, %s115
      %p117 = scmp.eq.s32.totalorder %s23, 0
      %p118 = por %p116, %p117
      %p119 = scmp.le.s32.totalorder 1, %s17
      %p120 = scmp.lt.s32.totalorder %s17, 3
      %p121 = pnand %p119, %p120
      %p122 = pneg %p121
      // Predicated region
      $region9: #{tpu_custom_call.1} parent=5 // pred_check
        _
      $region10: #{tpu_custom_call.1} parent=5 // pred_check_branch
        %124 = sbr.rel (%p121) target = $region12
      $region11: #{tpu_custom_call.1} parent=5 // pred_region
        %s125 = ssub.s32 %s17, 1
      $region12: #{tpu_custom_call.1} parent=5 // pred_fallthru
        _
      %p126 = scmp.lt.s32.totalorder %s17, 2
      // Predicated region
      $region13: #{tpu_custom_call.1} parent=5 // pred_check
        %p127 = pneg %p126
      $region14: #{tpu_custom_call.1} parent=5 // pred_check_branch
        %129 = sbr.rel (%p127) target = $region16
      $region15: #{tpu_custom_call.1} parent=5 // pred_region
        // Predicated region
        $region17: #{tpu_custom_call.1} parent=15 // pred_check
          %p130 = pneg %p49
        $region18: #{tpu_custom_call.1} parent=15 // pred_check_branch
          %132 = sbr.rel (%p130) target = $region20
        $region19: #{tpu_custom_call.1} parent=15 // pred_region
          %s133 = sand.u32 %s39, 1
          %s134 = scalar_lea.sflag [#allocation3], %s133
          %s135 = sand.u32 %s39, 1
          %s136 = smul.addr %s135, 2
          %s137 = scalar_lea.vmem [#allocation2], %s136
          %s139 = ssub.s32 32, 32
          %140 = vsyncadd %s134, %s139
          %s141 = smul.addr %s24, 32
          %s142 = scalar_lea.hbm %s0, %s141
          %s144 = sshll.u32 %s137, 4
          %s145 = int_to_ptr.vmem [resolvable:$true] %s144
          %147 = dma.hbm_to_vmem [thread:$0]  %s142, 32, %s145, %s134
        $region20: #{tpu_custom_call.1} parent=15 // pred_fallthru
          _
        // Predicated region
        $region21: #{tpu_custom_call.1} parent=15 // pred_check
          %p148 = pneg %p77
        $region22: #{tpu_custom_call.1} parent=15 // pred_check_branch
          %150 = sbr.rel (%p148) target = $region24
        $region23: #{tpu_custom_call.1} parent=15 // pred_region
          %s151 = sand.u32 %s67, 1
          %s152 = scalar_lea.sflag [#allocation6], %s151
          %s153 = sand.u32 %s67, 1
          %s154 = smul.addr %s153, 8
          %s155 = scalar_lea.vmem [#allocation5], %s154
          %s157 = ssub.s32 128, 128
          %158 = vsyncadd %s152, %s157
          %s159 = sadd.s32 %s25, %s24
          %s160 = smul.addr %s159, 128
          %s161 = scalar_lea.hbm %s1, %s160
          %s163 = sshll.u32 %s155, 4
          %s164 = int_to_ptr.vmem [resolvable:$true] %s163
          %166 = dma.hbm_to_vmem [thread:$0]  %s161, 128, %s164, %s152
        $region24: #{tpu_custom_call.1} parent=15 // pred_fallthru
          _
      $region16: #{tpu_custom_call.1} parent=5 // pred_fallthru
        _
      %p167 = scmp.le.s32.totalorder 1, %s17
      %p168 = scmp.lt.s32.totalorder %s17, 3
      %p169 = pnand %p167, %p168
      %p170 = pneg %p169
      // Predicated region
      $region25: #{tpu_custom_call.1} parent=5 // pred_check
        _
      $region26: #{tpu_custom_call.1} parent=5 // pred_check_branch
        %172 = sbr.rel (%p169) target = $region28
      $region27: #{tpu_custom_call.1} parent=5 // pred_region
        %s173 = ssub.s32 %s17, 1
        %s174 = sand.u32 %s42, 1
        %s175 = scalar_lea.sflag [#allocation3], %s174
        %s176 = sand.u32 %s42, 1
        %s177 = smul.addr %s176, 2
        %s178 = scalar_lea.vmem [#allocation2], %s177
        // Predicated region
        $region29: #{tpu_custom_call.1} parent=27 // pred_check
          %p179 = pneg %p55
        $region30: #{tpu_custom_call.1} parent=27 // pred_check_branch
          %181 = sbr.rel (%p179) target = $region32
        $region31: #{tpu_custom_call.1} parent=27 // pred_region
          %182 = dma.done %s175, 32
        $region32: #{tpu_custom_call.1} parent=27 // pred_fallthru
          _
        %s183 = sand.u32 %s70, 1
        %s184 = scalar_lea.sflag [#allocation6], %s183
        %s185 = sand.u32 %s70, 1
        %s186 = smul.addr %s185, 8
        %s187 = scalar_lea.vmem [#allocation5], %s186
        // Predicated region
        $region33: #{tpu_custom_call.1} parent=27 // pred_check
          %p188 = pneg %p83
        $region34: #{tpu_custom_call.1} parent=27 // pred_check_branch
          %190 = sbr.rel (%p188) target = $region36
        $region35: #{tpu_custom_call.1} parent=27 // pred_region
          %191 = dma.done %s184, 128
        $region36: #{tpu_custom_call.1} parent=27 // pred_fallthru
          _
        %s192 = sand.u32 %s42, 1
        %s193 = scalar_lea.sflag [#allocation3], %s192
        %s194 = sand.u32 %s42, 1
        %s195 = smul.addr %s194, 2
        %s196 = scalar_lea.vmem [#allocation2], %s195
        %p197 = pneg %p55
        %p198 = pneg %p52
        %s199 = sand.u32 %s70, 1
        %s200 = scalar_lea.sflag [#allocation6], %s199
        %s201 = sand.u32 %s70, 1
        %s202 = smul.addr %s201, 8
        %s203 = scalar_lea.vmem [#allocation5], %s202
        %p204 = pneg %p83
        %p205 = pneg %p80
        %p206 = pneg %p111
        %p207 = pneg %p108
        %s208 = sand.u32 %s98, 1
        %s209 = scalar_lea.sflag [#allocation4], %s208
        %s210 = sand.u32 %s98, 1
        %s211 = smul.addr %s210, 8
        %s212 = scalar_lea.vmem [#allocation7], %s211
        %v213 = vld [vmem:[%s178] sm:$0x3]
        %v214 = vld [vmem:[%s187] sm:$0xff]
        %v215 = vmul.f32 %v214, %v214
        %vm216 = vcmask 261120
        %v217 = vsel %vm216, %v215, 0.0
        %218 = vadd.xlane.f32.xlu0 %v217
        %v219 = vpop.xlane.xlu0 %218
        %v220 = vmul.f32 %v219, 0.03125
        %v221 = vadd.f32 %v220, 1e-08
        %v222 = vrsqrt.pop %v221
        %v223 = vmul.f32 %v214, %v222
        %v224 = vlaneseq
        %v225 = vshrl.u32 %v224, 7
        %v226 = vsub.s32 0, %v225
        %v227 = vrot.slane %v213, %v226
        %v228 = vmul.f32 %v223, %v227
        %v229 = vlaneseq
        %v230 = vshrl.u32 %v229, 7
        %v231 = vsub.s32 1, %v230
        %v232 = vrot.slane %v213, %v231
        %v233 = vadd.f32 %v228, %v232
        %v234 = vmul.f32 %v233, 0.2
        %v235 = vmax.f32 %v233, %v234
        %236 = vst.msk [vmem:[%s212] sm:$0xff] %vm216, %v235
        %s237 = sand.u32 %s98, 1
        %s238 = scalar_lea.sflag [#allocation4], %s237
        %s239 = sand.u32 %s98, 1
        %s240 = smul.addr %s239, 8
        %s241 = scalar_lea.vmem [#allocation7], %s240
        // Predicated region
        $region37: #{tpu_custom_call.1} parent=27 // pred_check
          %p242 = pneg %p108
        $region38: #{tpu_custom_call.1} parent=27 // pred_check_branch
          %244 = sbr.rel (%p242) target = $region40
        $region39: #{tpu_custom_call.1} parent=27 // pred_region
          %s246 = ssub.s32 128, 128
          %247 = vsyncadd %s238, %s246
          %s248 = sadd.s32 %s27, %s26
          %s249 = smul.addr %s248, 128
          %s250 = scalar_lea.hbm %s2, %s249
          %s252 = sshll.u32 %s241, 4
          %s253 = int_to_ptr.vmem [resolvable:$true] %s252
          %255 = dma.vmem_to_hbm [thread:$0]  %s253, 128, %s250, %s238
        $region40: #{tpu_custom_call.1} parent=27 // pred_fallthru
          _
      $region28: #{tpu_custom_call.1} parent=5 // pred_fallthru
        _
      %p256 = scmp.le.s32.totalorder 2, %s17
      // Predicated region
      $region41: #{tpu_custom_call.1} parent=5 // pred_check
        %p257 = pneg %p256
      $region42: #{tpu_custom_call.1} parent=5 // pred_check_branch
        %259 = sbr.rel (%p257) target = $region44
      $region43: #{tpu_custom_call.1} parent=5 // pred_region
        %s260 = ssub.s32 %s17, 2
        // Predicated region
        $region45: #{tpu_custom_call.1} parent=43 // pred_check
          %p261 = pneg %p114
        $region46: #{tpu_custom_call.1} parent=43 // pred_check_branch
          %263 = sbr.rel (%p261) target = $region48
        $region47: #{tpu_custom_call.1} parent=43 // pred_region
          %s264 = sand.u32 %s99, 1
          %s265 = scalar_lea.sflag [#allocation4], %s264
          %s266 = sand.u32 %s99, 1
          %s267 = smul.addr %s266, 8
          %s268 = scalar_lea.vmem [#allocation7], %s267
          %269 = dma.done %s265, 128
        $region48: #{tpu_custom_call.1} parent=43 // pred_fallthru
          _
      $region44: #{tpu_custom_call.1} parent=5 // pred_fallthru
        _
    $region6: #{tpu_custom_call.1} parent=1 // loop_footer
      %s21 = sadd.s32 1, %s17
    $region7: #{tpu_custom_call.1} parent=1 // loop_footer_branch
      %16 = sbr.rel target = $region3
    $region8: #{tpu_custom_call.1} parent=1 // loop_exit
      _
    %270 = vsyncpa [#allocation3], 1
    %s271 = scalar_lea.sflag [#allocation3], 1
    %272 = vsyncpa %s271, 1
    %273 = vsyncpa [#allocation6], 1
    %s274 = scalar_lea.sflag [#allocation6], 1
    %275 = vsyncpa %s274, 1
    %276 = vsyncpa [#allocation4], 1
    %s277 = scalar_lea.sflag [#allocation4], 1
    %278 = vsyncpa %s277, 1

</llo_original>
